<compile_context>
chip_gen: v7x
topology: tpu7x:2x2x1
jax: 0.10.0
libtpu: 0.0.40
codegen_flags: <defaults>
</compile_context>

<pallas_src>
import jax
import jax.numpy as jnp
from jax.experimental import pallas as pl
from jax.experimental.pallas import tpu as pltpu


def _mlp2_kernel(x_ref, wt_ref, b_ref, o_ref):
    # x_ref : (tm, K)  VMEM          wt_ref: (K, 2) VMEM  (weight^T, x.dtype)
    # b_ref : (2,)     SMEM  f32     o_ref : (2, tm) VMEM (probs^T, lane-dense)
    logits = jnp.dot(x_ref[...], wt_ref[...],
                     preferred_element_type=jnp.float32)       # (tm, 2) f32, MXU-native
    logits_t = logits.T                                        # small result transpose -> (2, tm)

    l0 = logits_t[0:1, :] + b_ref[0]                           # (1, tm)
    l1 = logits_t[1:2, :] + b_ref[1]                           # (1, tm)

    # LeakyReLU (PyTorch default negative_slope = 0.01)
    a0 = jnp.where(l0 >= 0, l0, 0.01 * l0)
    a1 = jnp.where(l1 >= 0, l1, 0.01 * l1)

    # 2-way softmax over the class axis: elementwise only, exact arithmetic.
    m = jnp.maximum(a0, a1)
    e0 = jnp.exp(a0 - m)
    e1 = jnp.exp(a1 - m)
    inv = 1.0 / (e0 + e1)                                      # exact (kernel is DMA-bound)

    o_ref[0:1, :] = (e0 * inv).astype(o_ref.dtype)             # store rows via slices,
    o_ref[1:2, :] = (e1 * inv).astype(o_ref.dtype)             # no concatenate temp


def _tile_rows(N, K, x_itemsize):
    """Row-tile size, padded row extent and VMEM limit for the running TPU generation."""
    k_pad = pl.cdiv(K, 128) * 128                 # lane-padded K = real VMEM row footprint
    try:
        vmem_cap = int(pltpu.get_tpu_info().vmem_capacity_bytes)
    except Exception:                             # no query available: assume 128 MiB class
        vmem_cap = 128 * 1024 * 1024

    if vmem_cap <= 80 * 1024 * 1024:              # v7x-class: 64 MiB/TC, ~3.2 TB/s HBM
        x_buf_bytes = 8 * 1024 * 1024             # bigger tiles: fixed step overhead hurts more
        vmem_limit = min(vmem_cap * 3 // 4, 48 * 1024 * 1024)
    else:                                         # v5e / v6e: 128 MiB physical VMEM
        x_buf_bytes = 4 * 1024 * 1024
        vmem_limit = 64 * 1024 * 1024             # explicitly above v5e's 16 MiB default

    n128 = pl.cdiv(N, 128) * 128                  # rows rounded up (lane-dense output extent)

    tm = x_buf_bytes // (k_pad * x_itemsize)
    tm = max(128, (tm // 128) * 128)
    # Keep ~8 grid steps when N allows: overlaps DMA with compute and lets the
    # "parallel" row axis shard across both TensorCores on v7x.
    min_steps = 8
    tm_cap = max(128, pl.cdiv(pl.cdiv(n128, min_steps), 128) * 128)
    tm = min(tm, tm_cap, n128)
    return tm, n128, int(vmem_limit)


def mlp2_forward(x, weight, bias):
    """Fused Linear(n_mlp, 2) + LeakyReLU + softmax(dim=1).

    x: [N, n_mlp], weight: [2, n_mlp] (torch Linear layout), bias: [2].
    Returns [N, 2] in x.dtype.
    """
    N, K = x.shape
    assert weight.shape == (2, K), "weight must be (2, n_mlp) in torch Linear layout"
    x_isz = jnp.dtype(x.dtype).itemsize

    tm, n128, vmem_limit = _tile_rows(N, K, x_isz)
    grid_m = pl.cdiv(n128, tm)

    w_t = jnp.asarray(weight).T.astype(x.dtype)           # (K, 2): MXU-native RHS
    bias_f32 = jnp.asarray(bias, jnp.float32).reshape(2)  # two scalars in SMEM

    cost = pl.CostEstimate(
        flops=2 * N * K * 2,
        transcendentals=2 * N,
        bytes_accessed=N * K * x_isz + 2 * K * x_isz + 2 * N * x_isz,
    )

    out_t = pl.pallas_call(
        _mlp2_kernel,
        out_shape=jax.ShapeDtypeStruct((2, n128), x.dtype),
        grid_spec=pltpu.PrefetchScalarGridSpec(
            num_scalar_prefetch=0,
            grid=(grid_m,),
            in_specs=[
                pl.BlockSpec((tm, K), lambda i: (i, 0)),             # x row tile (ragged tail OK)
                pl.BlockSpec((K, 2), lambda i: (0, 0)),              # weight^T, resident
                pl.BlockSpec(memory_space=pltpu.MemorySpace.SMEM),   # bias scalars
            ],
            out_specs=pl.BlockSpec((2, tm), lambda i: (0, i)),       # lane-dense probs^T
        ),
        compiler_params=pltpu.CompilerParams(
            dimension_semantics=("parallel",),
            vmem_limit_bytes=vmem_limit,
        ),
        cost_estimate=cost,
    )(x, w_t, bias_f32)

    # Garbage columns >= N (from the ragged final block) are sliced off here.
    return out_t[:, :N].T


def mlp2_reference(x, weight, bias):
    logits = x.astype(jnp.float32) @ weight.T.astype(jnp.float32) + bias.astype(jnp.float32)
    act = jnp.where(logits >= 0, logits, 0.01 * logits)
    return jax.nn.softmax(act, axis=1).astype(x.dtype)


if __name__ == "__main__":
    key = jax.random.PRNGKey(0)
    n_mlp = 32
    N = 8

    kx, kw, kb = jax.random.split(key, 3)
    x = jax.random.normal(kx, (N, n_mlp), dtype=jnp.float32)

    # Deterministic parameter init mimicking torch Linear's U(-1/sqrt(fan_in), +bound)
    bound = 1.0 / jnp.sqrt(jnp.float32(n_mlp))
    weight = jax.random.uniform(kw, (2, n_mlp), jnp.float32, -bound, bound)
    bias = jax.random.uniform(kb, (2,), jnp.float32, -bound, bound)

    out = mlp2_forward(x, weight, bias)
    out = jax.block_until_ready(out)

    ref = mlp2_reference(x, weight, bias)
    assert out.shape == (N, 2)
    assert jnp.allclose(out, ref, atol=1e-5, rtol=1e-5), "mismatch vs reference"

    print("KERNEL_OK")
</pallas_src>

<mosaic_0001>
module attributes {stable_mosaic.version = 11 : i64} {
  func.func @_mlp2_kernel(%arg0: i32, %arg1: memref<128x32xf32, #tpu.memory_space<vmem>>, %arg2: memref<32x2xf32, #tpu.memory_space<vmem>>, %arg3: memref<2xf32, #tpu.memory_space<smem>>, %arg4: memref<2x128xf32, #tpu.memory_space<vmem>>) attributes {dimension_semantics = [#tpu.dimension_semantics<parallel>], iteration_bounds = array<i64: 1>, scalar_prefetch = 0 : i64, scratch_operands = 0 : i64, tpu.core_type = #tpu.core_type<tc>, window_params = [{transform_indices = @transform_0, window_bounds = array<i64: 128, 32>}, {pipeline_mode = #tpu.pipeline_mode<synchronous>, transform_indices = @transform_1, window_bounds = array<i64: 32, 2>}, {transform_indices = @transform_2, window_bounds = array<i64: 2>}, {transform_indices = @transform_3, window_bounds = array<i64: 2, 128>}]} {
    %c0 = arith.constant 0 : index
    %c0_0 = arith.constant 0 : index
    %0 = vector.load %arg1[%c0, %c0_0] : memref<128x32xf32, #tpu.memory_space<vmem>>, vector<128x32xf32>
    %c0_1 = arith.constant 0 : index
    %c0_2 = arith.constant 0 : index
    %1 = vector.load %arg2[%c0_1, %c0_2] : memref<32x2xf32, #tpu.memory_space<vmem>>, vector<32x2xf32>
    %cst = arith.constant dense<0.000000e+00> : vector<128x2xf32>
    %2 = tpu.matmul %0, %1, %cst {dimension_numbers = #tpu.dot_dimension_numbers<[1], [0], [0], [1], [0, 0, 1, 1], [], []>} : vector<128x32xf32>, vector<32x2xf32>, vector<128x2xf32> -> vector<128x2xf32>
    %3 = tpu.transpose %2, [1, 0] : vector<128x2xf32> -> vector<2x128xf32>
    %4 = vector.extract_strided_slice %3 {offsets = [0, 0], sizes = [1, 128], strides = [1, 1]} : vector<2x128xf32> to vector<1x128xf32>
    %c0_3 = arith.constant 0 : index
    %5 = memref.load %arg3[%c0_3] : memref<2xf32, #tpu.memory_space<smem>>
    %6 = vector.broadcast %5 : f32 to vector<1x128xf32>
    %7 = arith.addf %4, %6 : vector<1x128xf32>
    %8 = vector.extract_strided_slice %3 {offsets = [1, 0], sizes = [1, 128], strides = [1, 1]} : vector<2x128xf32> to vector<1x128xf32>
    %c1 = arith.constant 1 : index
    %9 = memref.load %arg3[%c1] : memref<2xf32, #tpu.memory_space<smem>>
    %10 = vector.broadcast %9 : f32 to vector<1x128xf32>
    %11 = arith.addf %8, %10 : vector<1x128xf32>
    %cst_4 = arith.constant 0.000000e+00 : f32
    %12 = vector.broadcast %cst_4 : f32 to vector<1x128xf32>
    %13 = arith.cmpf oge, %7, %12 : vector<1x128xf32>
    %cst_5 = arith.constant 0.00999999977 : f32
    %14 = vector.broadcast %cst_5 : f32 to vector<1x128xf32>
    %15 = arith.mulf %14, %7 : vector<1x128xf32>
    %16 = arith.select %13, %7, %15 : vector<1x128xi1>, vector<1x128xf32>
    %cst_6 = arith.constant 0.000000e+00 : f32
    %17 = vector.broadcast %cst_6 : f32 to vector<1x128xf32>
    %18 = arith.cmpf oge, %11, %17 : vector<1x128xf32>
    %cst_7 = arith.constant 0.00999999977 : f32
    %19 = vector.broadcast %cst_7 : f32 to vector<1x128xf32>
    %20 = arith.mulf %19, %11 : vector<1x128xf32>
    %21 = arith.select %18, %11, %20 : vector<1x128xi1>, vector<1x128xf32>
    %22 = arith.maximumf %16, %21 : vector<1x128xf32>
    %23 = arith.subf %16, %22 : vector<1x128xf32>
    %24 = math.exp %23 : vector<1x128xf32>
    %25 = arith.subf %21, %22 : vector<1x128xf32>
    %26 = math.exp %25 : vector<1x128xf32>
    %27 = arith.addf %24, %26 : vector<1x128xf32>
    %cst_8 = arith.constant 1.000000e+00 : f32
    %28 = vector.broadcast %cst_8 : f32 to vector<1x128xf32>
    %29 = arith.divf %28, %27 : vector<1x128xf32>
    %30 = arith.mulf %24, %29 : vector<1x128xf32>
    %c0_9 = arith.constant 0 : index
    %c0_10 = arith.constant 0 : index
    %31 = vector.load %arg4[%c0_9, %c0_10] : memref<2x128xf32, #tpu.memory_space<vmem>>, vector<1x128xf32>
    tpu.vector_store %arg4[%c0_9, %c0_10], %30 {strides = array<i32>} : memref<2x128xf32, #tpu.memory_space<vmem>>, vector<1x128xf32>,
    %32 = arith.mulf %26, %29 : vector<1x128xf32>
    %c1_11 = arith.constant 1 : index
    %c0_12 = arith.constant 0 : index
    %33 = vector.load %arg4[%c1_11, %c0_12] : memref<2x128xf32, #tpu.memory_space<vmem>>, vector<1x128xf32>
    tpu.vector_store %arg4[%c1_11, %c0_12], %32 {strides = array<i32>} : memref<2x128xf32, #tpu.memory_space<vmem>>, vector<1x128xf32>,
    return
  }
  func.func @transform_0(%arg0: i32) -> (i32, i32) {
    %c0_i32 = arith.constant 0 : i32
    %c0_i32_0 = arith.constant 0 : i32
    return %arg0, %c0_i32 : i32, i32
  }
  func.func @transform_1(%arg0: i32) -> (i32, i32) {
    %c0_i32 = arith.constant 0 : i32
    %c0_i32_0 = arith.constant 0 : i32
    %c0_i32_1 = arith.constant 0 : i32
    return %c0_i32, %c0_i32_0 : i32, i32
  }
  func.func @transform_2(%arg0: i32) -> i32 {
    %c0_i32 = arith.constant 0 : i32
    %c0_i32_0 = arith.constant 0 : i32
    return %c0_i32 : i32
  }
  func.func @transform_3(%arg0: i32) -> (i32, i32) {
    %c0_i32 = arith.constant 0 : i32
    %c0_i32_0 = arith.constant 0 : i32
    return %c0_i32, %arg0 : i32, i32
  }
}

</mosaic_0001>

<llo_original>
// kernel: tpu_custom_call.1
$region0: #{tpu_custom_call.1}
  #allocation0 [shape = 'u32[]', space=smem, size = 0x4, offset = 0x4, fixed_abs, tag = 'smem constant byte address 0x4 - core index']
  #allocation1 [shape = 'u32[144,128]{1,0:T(1,128)}', space=vmem, size = 0x12000, scoped, tag = 'internal scratch']
  %s0 = inlined_call_operand.hbm [shape: f32[8,32], index: 0, kind: input, shape index: {}]
  %s1 = inlined_call_operand.hbm [shape: f32[32,2], index: 1, kind: input, shape index: {}]
  %s2 = inlined_call_operand.hbm [shape: f32[2], index: 2, kind: input, shape index: {}]
  %s3 = inlined_call_operand.hbm [shape: f32[2,128], index: 3, kind: output, shape index: {}]
  %s4 = sld [smem:[#allocation0]]
  $region34: #{tpu_custom_call.1} parent=0
    _
  %s6 = ssub.s32 1, %s4
  %s7 = scalar_select 0, %s6, %s4
  $region1: #{tpu_custom_call.1} parent=0
    #allocation2 [shape = 'u8[65536]{0}', space=vmem, size = 0x10000, scoped, tag = 'input window, operand 0, single buffered']
    #allocation3 [shape = 's32[1]{0}', space=sflag, size = 0x4, scoped, tag = 'scoped memory for tpu_custom_call.1']
    #allocation4 [shape = 's32[1]{0}', space=sflag, size = 0x4, scoped, tag = 'scoped memory for tpu_custom_call.1']
    #allocation5 [shape = 's32[1]{0}', space=sflag, size = 0x4, scoped, tag = 'scoped memory for tpu_custom_call.1']
    #allocation6 [shape = 'u8[16384]{0}', space=vmem, size = 0x4000, scoped, tag = 'input window, operand 1, single buffered']
    #allocation7 [shape = 's32[1]{0}', space=sflag, size = 0x4, scoped, tag = 'scoped memory for tpu_custom_call.1']
    #allocation8 [shape = 'u8[512]{0}', space=smem, size = 0x200, scoped, tag = 'input window, operand 2, single buffered']
    #allocation9 [shape = 'u8[1024]{0}', space=vmem, size = 0x400, scoped, tag = 'output window, operand 0, single buffered']
    %8 = vsyncpa [#allocation3], 0
    %9 = vsyncpa [#allocation7], 0
    %10 = vsyncpa [#allocation5], 0
    %11 = vsyncpa [#allocation4], 0
    // Predicated region
    $region2: #{tpu_custom_call.1} parent=1 // pred_check
      _
    $region3: #{tpu_custom_call.1} parent=1 // pred_check_branch
      %13 = sbr.rel (0) target = $region5
    $region4: #{tpu_custom_call.1} parent=1 // pred_region
      %s15 = ssub.s32 2048, 128
      %16 = vsyncadd [#allocation3], %s15
      %s17 = sshll.u32 [#allocation2], 4
      %s18 = int_to_ptr.vmem [resolvable:$true] %s17
      %23 = dma.hbm_to_vmem [thread:$0]  %s0, 128, %s18, [#allocation3], 128, 128, 8
    $region5: #{tpu_custom_call.1} parent=1 // pred_fallthru
      _
    // Predicated region
    $region6: #{tpu_custom_call.1} parent=1 // pred_check
      _
    $region7: #{tpu_custom_call.1} parent=1 // pred_check_branch
      %25 = sbr.rel (0) target = $region9
    $region8: #{tpu_custom_call.1} parent=1 // pred_region
      %s27 = ssub.s32 512, 512
      %28 = vsyncadd [#allocation7], %s27
      %s29 = sshll.u32 [#allocation6], 4
      %s30 = int_to_ptr.vmem [resolvable:$true] %s29
      %35 = dma.hbm_to_vmem [thread:$0]  %s1, 512, %s30, [#allocation7], 128, 128, 8
    $region9: #{tpu_custom_call.1} parent=1 // pred_fallthru
      _
    // Predicated region
    $region10: #{tpu_custom_call.1} parent=1 // pred_check
      _
    $region11: #{tpu_custom_call.1} parent=1 // pred_check_branch
      %37 = sbr.rel (0) target = $region13
    $region12: #{tpu_custom_call.1} parent=1 // pred_region
      %s39 = ssub.s32 16, 16
      %40 = vsyncadd [#allocation5], %s39
      %43 = dma.hbm_to_smem %s2, 16, [#allocation8], [#allocation5]
    $region13: #{tpu_custom_call.1} parent=1 // pred_fallthru
      _
    // Predicated region
    $region14: #{tpu_custom_call.1} parent=1 // pred_check
      _
    $region15: #{tpu_custom_call.1} parent=1 // pred_check_branch
      %45 = sbr.rel (0) target = $region17
    $region16: #{tpu_custom_call.1} parent=1 // pred_region
      %46 = dma.done [#allocation3], 2048
    $region17: #{tpu_custom_call.1} parent=1 // pred_fallthru
      _
    // Predicated region
    $region18: #{tpu_custom_call.1} parent=1 // pred_check
      _
    $region19: #{tpu_custom_call.1} parent=1 // pred_check_branch
      %48 = sbr.rel (0) target = $region21
    $region20: #{tpu_custom_call.1} parent=1 // pred_region
      %49 = dma.done [#allocation7], 512
    $region21: #{tpu_custom_call.1} parent=1 // pred_fallthru
      _
    // Predicated region
    $region22: #{tpu_custom_call.1} parent=1 // pred_check
      _
    $region23: #{tpu_custom_call.1} parent=1 // pred_check_branch
      %51 = sbr.rel (0) target = $region25
    $region24: #{tpu_custom_call.1} parent=1 // pred_region
      %52 = dma.done [#allocation5], 16
    $region25: #{tpu_custom_call.1} parent=1 // pred_fallthru
      _
    %53 = sfence
    %v54 = vld [vmem:[#allocation2] sm:$0xff]
    %v55 = vld [vmem:[#allocation2 + $0x8] sm:$0xff]
    %v56 = vld [vmem:[#allocation2 + $0x10] sm:$0xff]
    %v57 = vld [vmem:[#allocation2 + $0x18] sm:$0xff]
    %v58 = vld [vmem:[#allocation2 + $0x20] sm:$0xff]
    %v59 = vld [vmem:[#allocation2 + $0x28] sm:$0xff]
    %v60 = vld [vmem:[#allocation2 + $0x30] sm:$0xff]
    %v61 = vld [vmem:[#allocation2 + $0x38] sm:$0xff]
    %v62 = vld [vmem:[#allocation2 + $0x40] sm:$0xff]
    %v63 = vld [vmem:[#allocation2 + $0x48] sm:$0xff]
    %v64 = vld [vmem:[#allocation2 + $0x50] sm:$0xff]
    %v65 = vld [vmem:[#allocation2 + $0x58] sm:$0xff]
    %v66 = vld [vmem:[#allocation2 + $0x60] sm:$0xff]
    %v67 = vld [vmem:[#allocation2 + $0x68] sm:$0xff]
    %v68 = vld [vmem:[#allocation2 + $0x70] sm:$0xff]
    %v69 = vld [vmem:[#allocation2 + $0x78] sm:$0xff]
    %v70 = vld [vmem:[#allocation6] sm:$0xff]
    %v71 = vld [vmem:[#allocation6 + $0x8] sm:$0xff]
    %v72 = vld [vmem:[#allocation6 + $0x10] sm:$0xff]
    %v73 = vld [vmem:[#allocation6 + $0x18] sm:$0xff]
    %vm74 = vcmask 261120
    %v76 = vsel %vm74, %v54, 0
    %v79 = vsel %vm74, %v55, 0
    %v82 = vsel %vm74, %v56, 0
    %v85 = vsel %vm74, %v57, 0
    %v88 = vsel %vm74, %v58, 0
    %v91 = vsel %vm74, %v59, 0
    %v94 = vsel %vm74, %v60, 0
    %v97 = vsel %vm74, %v61, 0
    %v100 = vsel %vm74, %v62, 0
    %v103 = vsel %vm74, %v63, 0
    %v106 = vsel %vm74, %v64, 0
    %v109 = vsel %vm74, %v65, 0
    %v112 = vsel %vm74, %v66, 0
    %v115 = vsel %vm74, %v67, 0
    %v118 = vsel %vm74, %v68, 0
    %v121 = vsel %vm74, %v69, 0
    %123 = vmatprep.subr.mxu0 0.0
    %124 = vmatpush1.msra.mxu0 %v70
    %125 = vmatprep.subr.mxu0 0.0
    %126 = vmatpush1.msra.mxu0 %v71
    %127 = vmatprep.subr.mxu0 0.0
    %128 = vmatpush1.msra.mxu0 %v72
    %129 = vmatprep.subr.mxu0 0.0
    %130 = vmatpush1.msra.mxu0 %v73
    %131 = vmatprep.subr.mxu0 0.0
    %132 = vmatpush1.msra.mxu0 0.0
    %133 = vmatprep.subr.mxu0 0.0
    %134 = vmatpush1.msra.mxu0 0.0
    %135 = vmatprep.subr.mxu0 0.0
    %136 = vmatpush1.msra.mxu0 0.0
    %137 = vmatprep.subr.mxu0 0.0
    %138 = vmatpush1.msra.mxu0 0.0
    %139 = vmatprep.subr.mxu0 0.0
    %140 = vmatpush1.msra.mxu0 0.0
    %141 = vmatprep.subr.mxu0 0.0
    %142 = vmatpush1.msra.mxu0 0.0
    %143 = vmatprep.subr.mxu0 0.0
    %144 = vmatpush1.msra.mxu0 0.0
    %145 = vmatprep.subr.mxu0 0.0
    %146 = vmatpush1.msra.mxu0 0.0
    %147 = vmatprep.subr.mxu0 0.0
    %148 = vmatpush1.msra.mxu0 0.0
    %149 = vmatprep.subr.mxu0 0.0
    %150 = vmatpush1.msra.mxu0 0.0
    %151 = vmatprep.subr.mxu0 0.0
    %152 = vmatpush1.msra.mxu0 0.0
    %153 = vmatprep.subr.mxu0 0.0
    %154 = vmatpush1.msra.mxu0 0.0
    %155 = vmatprep.subr.mxu0 0.0
    %156 = vmatpush1.msra.mxu0 0.0
    %157 = vmatprep.subr.mxu0 0.0
    %158 = vmatpush1.msra.mxu0 0.0
    %159 = vmatprep.subr.mxu0 0.0
    %160 = vmatpush1.msra.mxu0 0.0
    %161 = vmatprep.subr.mxu0 0.0
    %162 = vmatpush1.msra.mxu0 0.0
    %163 = vmatprep.subr.mxu0 0.0
    %164 = vmatpush1.msra.mxu0 0.0
    %165 = vmatprep.subr.mxu0 0.0
    %166 = vmatpush1.msra.mxu0 0.0
    %167 = vmatprep.subr.mxu0 0.0
    %168 = vmatpush1.msra.mxu0 0.0
    %169 = vmatprep.subr.mxu0 0.0
    %170 = vmatpush1.msra.mxu0 0.0
    %171 = vmatprep.subr.mxu0 0.0
    %172 = vmatpush1.msra.mxu0 0.0
    %173 = vmatprep.subr.mxu0 0.0
    %174 = vmatpush1.msra.mxu0 0.0
    %175 = vmatprep.subr.mxu0 0.0
    %176 = vmatpush1.msra.mxu0 0.0
    %177 = vmatprep.subr.mxu0 0.0
    %178 = vmatpush1.msra.mxu0 0.0
    %179 = vmatprep.subr.mxu0 0.0
    %180 = vmatpush1.msra.mxu0 0.0
    %181 = vmatprep.subr.mxu0 0.0
    %182 = vmatpush1.msra.mxu0 0.0
    %183 = vmatprep.subr.mxu0 0.0
    %184 = vmatpush1.msra.mxu0 0.0
    %185 = vmatprep.subr.mxu0 0.0
    %186 = vmatpush1.msra.mxu0 0.0
    %187 = vmatprep.mubr.f32.mxu0 0.0
    %188 = vmatmul.mubr.f32.gmra.mrb[0].mxu0 %v76
    %v189 = vpop.f32.mrb[0].mxu0
    %v190 = vadd.f32 0.0, %v189
    %v191 = vpop.f32.mrb[0].mxu0
    %192 = vmatprep.mubr.f32.mxu0 0.0
    %193 = vmatmul.mubr.f32.gmra.mrb[0].mxu0 %v79
    %v194 = vpop.f32.mrb[0].mxu0
    %v195 = vadd.f32 0.0, %v194
    %v196 = vpop.f32.mrb[0].mxu0
    %197 = vmatprep.mubr.f32.mxu0 0.0
    %198 = vmatmul.mubr.f32.gmra.mrb[0].mxu0 %v82
    %v199 = vpop.f32.mrb[0].mxu0
    %v200 = vadd.f32 0.0, %v199
    %v201 = vpop.f32.mrb[0].mxu0
    %202 = vmatprep.mubr.f32.mxu0 0.0
    %203 = vmatmul.mubr.f32.gmra.mrb[0].mxu0 %v85
    %v204 = vpop.f32.mrb[0].mxu0
    %v205 = vadd.f32 0.0, %v204
    %v206 = vpop.f32.mrb[0].mxu0
    %207 = vmatprep.mubr.f32.mxu0 0.0
    %208 = vmatmul.mubr.f32.gmra.mrb[0].mxu0 %v88
    %v209 = vpop.f32.mrb[0].mxu0
    %v210 = vadd.f32 0.0, %v209
    %v211 = vpop.f32.mrb[0].mxu0
    %212 = vmatprep.mubr.f32.mxu0 0.0
    %213 = vmatmul.mubr.f32.gmra.mrb[0].mxu0 %v91
    %v214 = vpop.f32.mrb[0].mxu0
    %v215 = vadd.f32 0.0, %v214
    %v216 = vpop.f32.mrb[0].mxu0
    %217 = vmatprep.mubr.f32.mxu0 0.0
    %218 = vmatmul.mubr.f32.gmra.mrb[0].mxu0 %v94
    %v219 = vpop.f32.mrb[0].mxu0
    %v220 = vadd.f32 0.0, %v219
    %v221 = vpop.f32.mrb[0].mxu0
    %222 = vmatprep.mubr.f32.mxu0 0.0
    %223 = vmatmul.mubr.f32.gmra.mrb[0].mxu0 %v97
    %v224 = vpop.f32.mrb[0].mxu0
    %v225 = vadd.f32 0.0, %v224
    %v226 = vpop.f32.mrb[0].mxu0
    %227 = vmatprep.mubr.f32.mxu0 0.0
    %228 = vmatmul.mubr.f32.gmra.mrb[0].mxu0 %v100
    %v229 = vpop.f32.mrb[0].mxu0
    %v230 = vadd.f32 0.0, %v229
    %v231 = vpop.f32.mrb[0].mxu0
    %232 = vmatprep.mubr.f32.mxu0 0.0
    %233 = vmatmul.mubr.f32.gmra.mrb[0].mxu0 %v103
    %v234 = vpop.f32.mrb[0].mxu0
    %v235 = vadd.f32 0.0, %v234
    %v236 = vpop.f32.mrb[0].mxu0
    %237 = vmatprep.mubr.f32.mxu0 0.0
    %238 = vmatmul.mubr.f32.gmra.mrb[0].mxu0 %v106
    %v239 = vpop.f32.mrb[0].mxu0
    %v240 = vadd.f32 0.0, %v239
    %v241 = vpop.f32.mrb[0].mxu0
    %242 = vmatprep.mubr.f32.mxu0 0.0
    %243 = vmatmul.mubr.f32.gmra.mrb[0].mxu0 %v109
    %v244 = vpop.f32.mrb[0].mxu0
    %v245 = vadd.f32 0.0, %v244
    %v246 = vpop.f32.mrb[0].mxu0
    %247 = vmatprep.mubr.f32.mxu0 0.0
    %248 = vmatmul.mubr.f32.gmra.mrb[0].mxu0 %v112
    %v249 = vpop.f32.mrb[0].mxu0
    %v250 = vadd.f32 0.0, %v249
    %v251 = vpop.f32.mrb[0].mxu0
    %252 = vmatprep.mubr.f32.mxu0 0.0
    %253 = vmatmul.mubr.f32.gmra.mrb[0].mxu0 %v115
    %v254 = vpop.f32.mrb[0].mxu0
    %v255 = vadd.f32 0.0, %v254
    %v256 = vpop.f32.mrb[0].mxu0
    %257 = vmatprep.mubr.f32.mxu0 0.0
    %258 = vmatmul.mubr.f32.gmra.mrb[0].mxu0 %v118
    %v259 = vpop.f32.mrb[0].mxu0
    %v260 = vadd.f32 0.0, %v259
    %v261 = vpop.f32.mrb[0].mxu0
    %262 = vmatprep.mubr.f32.mxu0 0.0
    %263 = vmatmul.mubr.f32.gmra.mrb[0].mxu0 %v121
    %v264 = vpop.f32.mrb[0].mxu0
    %v265 = vadd.f32 0.0, %v264
    %v266 = vpop.f32.mrb[0].mxu0
    %267 = vdwg.mxu0
    %268 = vxpose.xlu0.b32.start [1/16] %v190, 128
    %269 = vxpose.xlu0.b32.cont [2/16] %v195, 128
    %270 = vxpose.xlu0.b32.cont [3/16] %v200, 128
    %271 = vxpose.xlu0.b32.cont [4/16] %v205, 128
    %272 = vxpose.xlu0.b32.cont [5/16] %v210, 128
    %273 = vxpose.xlu0.b32.cont [6/16] %v215, 128
    %274 = vxpose.xlu0.b32.cont [7/16] %v220, 128
    %275 = vxpose.xlu0.b32.cont [8/16] %v225, 128
    %276 = vxpose.xlu0.b32.cont [9/16] %v230, 128
    %277 = vxpose.xlu0.b32.cont [10/16] %v235, 128
    %278 = vxpose.xlu0.b32.cont [11/16] %v240, 128
    %279 = vxpose.xlu0.b32.cont [12/16] %v245, 128
    %280 = vxpose.xlu0.b32.cont [13/16] %v250, 128
    %281 = vxpose.xlu0.b32.cont [14/16] %v255, 128
    %282 = vxpose.xlu0.b32.cont [15/16] %v260, 128
    %283 = vxpose.xlu0.b32.end [16/16] %v265, 128
    %v284 = vpop.trf.xlu0
    %v285 = vpop.trf.xlu0
    %v286 = vpop.trf.xlu0
    %v287 = vpop.trf.xlu0
    %v288 = vpop.trf.xlu0
    %v289 = vpop.trf.xlu0
    %v290 = vpop.trf.xlu0
    %v291 = vpop.trf.xlu0
    %v292 = vpop.trf.xlu0
    %v293 = vpop.trf.xlu0
    %v294 = vpop.trf.xlu0
    %v295 = vpop.trf.xlu0
    %v296 = vpop.trf.xlu0
    %v297 = vpop.trf.xlu0
    %v298 = vpop.trf.xlu0
    %v299 = vpop.trf.xlu0
    %s300 = sld [smem:[#allocation8]]
    %v301 = vstv %s300
    %v302 = vadd.f32 %v284, %v301
    %s303 = sld [smem:[#allocation8 + $0x1]]
    %v304 = vstv %s303
    %v305 = vadd.f32 %v284, %v304
    %vm306 = vcmp.ge.f32.partialorder %v302, 0.0
    %v307 = vmul.f32 %v302, 0.01
    %v308 = vsel %vm306, %v302, %v307
    %vm309 = vcmp.ge.f32.partialorder %v305, 0.0
    %v310 = vmul.f32 %v305, 0.01
    %v311 = vsel %vm309, %v305, %v310
    %v313 = vrot.slane %v311, 1
    %v315 = vmax.f32 %v308, %v313
    %v316 = vsub.f32 %v308, %v315
    %v317 = vmul.f32 %v316, 1.442695
    %v318 = vpow.pop %v317
    %v320 = vrot.slane %v315, 7
    %v322 = vsub.f32 %v311, %v320
    %v323 = vmul.f32 %v322, 1.442695
    %v324 = vpow.pop %v323
    %v326 = vrot.slane %v324, 1
    %v328 = vadd.f32 %v318, %v326
    %v329 = vrcp.pop %v328
    %v330 = vmul.f32 1.0, %v329
    %v331 = vmul.f32 %v318, %v330
    %332 = vst [vmem:[#allocation9] sm:$0x1] %v331
    %v334 = vrot.slane %v330, 7
    %v336 = vmul.f32 %v324, %v334
    %337 = vst [vmem:[#allocation9] sm:$0x2] %v336
    // Predicated region
    $region26: #{tpu_custom_call.1} parent=1 // pred_check
      _
    $region27: #{tpu_custom_call.1} parent=1 // pred_check_branch
      %339 = sbr.rel (0) target = $region29
    $region28: #{tpu_custom_call.1} parent=1 // pred_region
      %s341 = ssub.s32 32, 32
      %342 = vsyncadd [#allocation4], %s341
      %s344 = sshll.u32 [#allocation9], 4
      %s345 = int_to_ptr.vmem [resolvable:$true] %s344
      %347 = dma.vmem_to_hbm [thread:$0]  %s345, 32, %s3, [#allocation4]
    $region29: #{tpu_custom_call.1} parent=1 // pred_fallthru
      _
    // Predicated region
    $region30: #{tpu_custom_call.1} parent=1 // pred_check
      _
    $region31: #{tpu_custom_call.1} parent=1 // pred_check_branch
      %349 = sbr.rel (0) target = $region33
    $region32: #{tpu_custom_call.1} parent=1 // pred_region
      %350 = dma.done [#allocation4], 32
    $region33: #{tpu_custom_call.1} parent=1 // pred_fallthru
      _
    %351 = vsyncpa [#allocation3], 1
    %352 = vsyncpa [#allocation7], 1
    %353 = vsyncpa [#allocation4], 1
    %354 = vsyncpa [#allocation5], 1

</llo_original>
